<compile_context>
chip_gen: v5e
topology: v5e:2x2
jax: 0.10.0
libtpu: 0.0.40
codegen_flags: <defaults>
</compile_context>

<pallas_src>
import math
from itertools import permutations

import numpy as np
import jax
import jax.numpy as jnp
from jax.experimental import pallas as pl
from jax.experimental.pallas import tpu as pltpu


_MAX_N_TILE = 65536     # upper bound on the lane-dim tile (multiple of 128)
_MAX_B_TILE = 16        # upper bound on batch elements per grid step


def _round_up(x, m):
    return -(-x // m) * m


def _make_pit_mse_kernel(*, S, b_tile, n_tile, n_total, n_perm, inv_ns, ragged_n):
    """Build the PIT-MSE kernel.  Only Python scalars are closed over."""
    bS = b_tile * S

    def kernel(w_ref, t_ref, p_ref, loss_ref, idx_ref, acc_ref, ssq_ref):
        ni = pl.program_id(1)

        @pl.when(ni == 0)
        def _init():
            acc_ref[...] = jnp.zeros_like(acc_ref)
            ssq_ref[...] = jnp.zeros_like(ssq_ref)

        t = t_ref[...]                       # [bS, n_tile]  target rows (b, i)
        p = p_ref[...]                       # [bS, n_tile]  pred   rows (b, j)
        if ragged_n:
            # Last N tile is partial: zero the out-of-range lanes (stale VMEM data)
            # before they can touch the accumulators.
            lane = jax.lax.broadcasted_iota(jnp.int32, t.shape, 1)
            valid = (ni * n_tile + lane) < n_total
            t = jnp.where(valid, t, jnp.zeros_like(t))
            p = jnp.where(valid, p, jnp.zeros_like(p))

        # Batch-folded cross Gram on the MXU: one weight-push stream per step serves
        # every batch element in the tile.  acc[b*S+i, b'*S+j] += sum_n t[b,i,n]p[b',j,n]
        acc_ref[...] += jax.lax.dot_general(
            t, p, (((1,), (1,)), ((), ())), preferred_element_type=jnp.float32)

        # Permutation-independent squared-sum term on the VPU/XLU slots (not MXU).
        tf = t.astype(jnp.float32)
        pf = p.astype(jnp.float32)
        ssq_ref[...] += jnp.sum(tf * tf + pf * pf, axis=1, keepdims=True)

        @pl.when(ni == pl.num_programs(1) - 1)
        def _finalize():
            big = acc_ref[...]                                    # [bS, bS] f32
            # Extract the per-batch diagonal SxS blocks: big[b*S+i, b*S+j] = cross_b[i,j]
            big4 = big.reshape(b_tile, S, b_tile, S)
            bidx = jax.lax.broadcasted_iota(jnp.int32, big4.shape, 0)
            cidx = jax.lax.broadcasted_iota(jnp.int32, big4.shape, 2)
            cross = jnp.sum(jnp.where(bidx == cidx, big4, 0.0), axis=2)   # [Bt, S, S]
            cross_flat = cross.reshape(b_tile, S * S)
            # Flattened epilogue matmul: scores[b, k] = -2 * sum_i cross_b[i, perm_k(i)]
            scores = jnp.dot(cross_flat, w_ref[...],
                             preferred_element_type=jnp.float32)          # [Bt, P]
            ssq_b = jnp.sum(ssq_ref[...].reshape(b_tile, S),
                            axis=1, keepdims=True)                        # [Bt, 1]
            loss_all = (ssq_b + scores) * inv_ns                          # [Bt, P]
            loss_min = jnp.min(loss_all, axis=-1, keepdims=True)          # [Bt, 1]
            # First index attaining the minimum == torch's strict-'>' earliest perm.
            perm_ids = jax.lax.broadcasted_iota(jnp.int32, loss_all.shape, 1)
            idx_min = jnp.min(
                jnp.where(loss_all <= loss_min, perm_ids, n_perm),
                axis=-1, keepdims=True)                                    # [Bt, 1]
            # Clamp cancellation-induced tiny negatives (true MSE >= 0).
            loss_ref[...] = jnp.maximum(loss_min, 0.0)[None]               # (1, Bt, 1)
            idx_ref[...] = idx_min[None]                                   # (1, Bt, 1)

    return kernel


def pit_mse_forward(preds, targets, *, b_tile_max=_MAX_B_TILE,
                    n_tile_max=_MAX_N_TILE, stream_dtype=None):
    """Pallas implementation of PitWrapper(nn.MSELoss(reduction='none')).forward.

    preds / targets: [batch, ..., sources] (sources last, as in the torch module).
    Returns (loss[batch] f32, perm_index[batch] int32) device arrays.  Use
    resolve_permutations() to turn indices into permutation tuples (host sync).
    stream_dtype=jnp.bfloat16 halves HBM traffic (numerics tradeoff vs f32 reference).
    """
    assert preds.shape == targets.shape
    B = int(preds.shape[0])
    S = int(preds.shape[-1])
    N = int(np.prod(preds.shape[1:-1])) if preds.ndim > 2 else 1

    perms = list(permutations(range(S)))
    n_perm = len(perms)

    # Epilogue weight [S*S, S!]: column k holds -2 at position i*S + perm_k(i), so
    # cross_flat @ W yields -2 * sum_i cross[i, perm_k(i)] for every permutation.
    w_np = np.zeros((S * S, n_perm), np.float32)
    for k, p in enumerate(perms):
        for i, j in enumerate(p):
            w_np[i * S + j, k] = -2.0
    w = jnp.asarray(w_np)

    # Single materialized layout pass per operand: [B,N,S] -> [B,S,N] -> [B*S,N].
    # No concatenate, no pad — ragged tiles are handled in-kernel.
    dt = jnp.dtype(stream_dtype) if stream_dtype is not None else jnp.dtype(preds.dtype)
    t2 = jnp.reshape(jnp.swapaxes(jnp.reshape(targets, (B, N, S)), 1, 2).astype(dt),
                     (B * S, N))
    p2 = jnp.reshape(jnp.swapaxes(jnp.reshape(preds, (B, N, S)), 1, 2).astype(dt),
                     (B * S, N))
    # TODO(synk): try pltpu.CompilerParams(allow_input_fusion=...) so XLA can fuse the
    # transpose into the operand DMA instead of materializing the [B*S, N] copy in HBM.

    # --- batch tile ------------------------------------------------------------
    # Rows of the folded operand (b_tile*S) must be a multiple of 8 unless they are
    # the full extent; aim for >= 2 batch tiles so the 'parallel' axis can shard
    # across v7x's two TensorCores.
    unit = 8 // math.gcd(S, 8)
    want = max(1, min(b_tile_max, -(-B // 2)))
    b_tile = _round_up(want, unit)
    if b_tile >= B:
        b_tile = B                      # single full-extent block (always legal)
    n_b_tiles = -(-B // b_tile)

    # --- lane tile ---------------------------------------------------------------
    # As large as the VMEM budget allows (fewer grid steps -> less per-step overhead);
    # budget sized off the detected VMEM capacity, naturally capped for v7x (64 MiB).
    try:
        vmem_cap = int(pltpu.get_tpu_info().vmem_capacity_bytes)
    except Exception:
        vmem_cap = 64 * 1024 * 1024
    vmem_limit = int(min(vmem_cap * 3 // 4, 100 * 1024 * 1024))
    stream_budget = int(vmem_limit * 0.6)            # 2 inputs x 2 pipeline buffers

    itemsize = jnp.dtype(dt).itemsize
    sub = 16 if itemsize == 2 else 8
    rows_pad = _round_up(b_tile * S, sub)
    n_by_budget = stream_budget // (4 * rows_pad * itemsize)
    n_tile_cap = max(128, min(int(n_tile_max), (n_by_budget // 128) * 128))
    n_tile = N if N <= n_tile_cap else n_tile_cap
    n_n_tiles = -(-N // n_tile)
    ragged_n = (N % n_tile) != 0

    kernel = _make_pit_mse_kernel(
        S=S, b_tile=b_tile, n_tile=n_tile, n_total=N, n_perm=n_perm,
        inv_ns=float(1.0 / (N * S)), ragged_n=ragged_n)

    loss, idx = pl.pallas_call(
        kernel,
        out_shape=(
            jax.ShapeDtypeStruct((n_b_tiles, b_tile, 1), jnp.float32),
            jax.ShapeDtypeStruct((n_b_tiles, b_tile, 1), jnp.int32),
        ),
        grid_spec=pltpu.PrefetchScalarGridSpec(
            num_scalar_prefetch=0,
            grid=(n_b_tiles, n_n_tiles),                  # N reduction axis last
            in_specs=[
                pl.BlockSpec((S * S, n_perm), lambda bi, ni: (0, 0)),
                pl.BlockSpec((b_tile * S, n_tile), lambda bi, ni: (bi, ni)),
                pl.BlockSpec((b_tile * S, n_tile), lambda bi, ni: (bi, ni)),
            ],
            out_specs=(
                pl.BlockSpec((1, b_tile, 1), lambda bi, ni: (bi, 0, 0)),
                pl.BlockSpec((1, b_tile, 1), lambda bi, ni: (bi, 0, 0)),
            ),
            scratch_shapes=[
                pltpu.VMEM((b_tile * S, b_tile * S), jnp.float32),
                pltpu.VMEM((b_tile * S, 1), jnp.float32),
            ],
        ),
        compiler_params=pltpu.CompilerParams(
            dimension_semantics=("parallel", "arbitrary"),
            vmem_limit_bytes=vmem_limit,
        ),
    )(w, t2, p2)

    loss = jnp.reshape(loss, (n_b_tiles * b_tile,))[:B]
    idx = jnp.reshape(idx, (n_b_tiles * b_tile,))[:B]
    return loss, idx


def resolve_permutations(idx, n_sources):
    """Convert permutation indices (device array) to the list of tuples the torch
    module returns.  Forces a host sync — call it outside the hot path."""
    perms = list(permutations(range(n_sources)))
    return [perms[int(k)] for k in np.asarray(jax.device_get(idx)).reshape(-1)]


def _ref_pit_mse(preds, targets):
    """Pure NumPy reference reproducing the PyTorch PitWrapper + MSE semantics."""
    preds = np.asarray(preds, np.float64)
    targets = np.asarray(targets, np.float64)
    B, S = preds.shape[0], preds.shape[-1]
    pr = preds.reshape(B, -1, S)
    tr = targets.reshape(B, -1, S)
    losses, out_perms = [], []
    for b in range(B):
        # loss_mat[i, j] = mean_n (pred[n, j] - tgt[n, i])^2
        lm = np.mean((pr[b][:, None, :] - tr[b][:, :, None]) ** 2, axis=0)
        best, bp = None, None
        for p in permutations(range(S)):
            c = np.mean(lm[np.arange(S), np.array(p)])
            if best is None or best > c:
                best, bp = c, p
        losses.append(best)
        out_perms.append(bp)
    return np.array(losses), out_perms


if __name__ == "__main__":
    key = jax.random.PRNGKey(0)
    k1, k2, k3, k4 = jax.random.split(key, 4)

    # Case 1 (docstring-style): predictions are a permutation of targets -> loss == 0.
    B, C, T, S = 2, 4, 16, 4
    targets = jax.random.uniform(k1, (B, C, T, S), dtype=jnp.float32)
    perm = jnp.array([3, 0, 2, 1])
    predictions = targets[..., perm]
    loss0, idx0 = pit_mse_forward(predictions, targets)
    loss0 = jax.block_until_ready(loss0)
    perms0 = resolve_permutations(idx0, S)
    assert np.allclose(np.asarray(loss0), 0.0, atol=1e-4), np.asarray(loss0)
    assert perms0 == [(1, 3, 2, 0)] * B, perms0   # inverse of (3, 0, 2, 1)

    # Case 2: random predictions, compared to the torch-semantics NumPy reference.
    rand_preds = jax.random.normal(k2, (B, C, T, S), dtype=jnp.float32)
    loss1, idx1 = pit_mse_forward(rand_preds, targets)
    loss1 = jax.block_until_ready(loss1)
    ref_loss, ref_perms = _ref_pit_mse(np.asarray(rand_preds), np.asarray(targets))
    assert np.allclose(np.asarray(loss1), ref_loss, rtol=1e-4, atol=1e-5), (
        np.asarray(loss1), ref_loss)
    assert resolve_permutations(idx1, S) == ref_perms

    # Case 3: exercises the N-tiling accumulation path, ragged-tile masking, and S=3.
    B2, C2, T2, S2 = 3, 5, 64, 3          # N = 320 -> three 128-wide tiles (ragged)
    tgt2 = jax.random.normal(k3, (B2, C2, T2, S2), dtype=jnp.float32)
    prd2 = jax.random.normal(k4, (B2, C2, T2, S2), dtype=jnp.float32)
    loss2, idx2 = pit_mse_forward(prd2, tgt2, n_tile_max=128)
    loss2 = jax.block_until_ready(loss2)
    ref_loss2, ref_perms2 = _ref_pit_mse(np.asarray(prd2), np.asarray(tgt2))
    assert np.allclose(np.asarray(loss2), ref_loss2, rtol=1e-4, atol=1e-5), (
        np.asarray(loss2), ref_loss2)
    assert resolve_permutations(idx2, S2) == ref_perms2

    print("KERNEL_OK")
</pallas_src>

<mosaic_0001>
module attributes {stable_mosaic.version = 11 : i64} {
  func.func @kernel(%arg0: i32, %arg1: i32, %arg2: memref<16x24xf32, #tpu.memory_space<vmem>>, %arg3: memref<8x64xf32, #tpu.memory_space<vmem>>, %arg4: memref<8x64xf32, #tpu.memory_space<vmem>>, %arg5: memref<1x2x1xf32, #tpu.memory_space<vmem>>, %arg6: memref<1x2x1xi32, #tpu.memory_space<vmem>>, %arg7: memref<8x8xf32, #tpu.memory_space<vmem>>, %arg8: memref<8x1xf32, #tpu.memory_space<vmem>>) attributes {dimension_semantics = [#tpu.dimension_semantics<parallel>, #tpu.dimension_semantics<arbitrary>], iteration_bounds = array<i64: 1, 1>, scalar_prefetch = 0 : i64, scratch_operands = 2 : i64, tpu.core_type = #tpu.core_type<tc>, window_params = [{pipeline_mode = #tpu.pipeline_mode<synchronous>, transform_indices = @transform_0, window_bounds = array<i64: 16, 24>}, {transform_indices = @transform_1, window_bounds = array<i64: 8, 64>}, {transform_indices = @transform_2, window_bounds = array<i64: 8, 64>}, {transform_indices = @transform_3, window_bounds = array<i64: 1, 2, 1>}, {transform_indices = @transform_4, window_bounds = array<i64: 1, 2, 1>}]} {
    %c0_i32 = arith.constant 0 : i32
    %0 = arith.cmpi eq, %arg1, %c0_i32 : i32
    %1 = arith.extui %0 : i1 to i32
    %c0_i32_0 = arith.constant 0 : i32
    %2 = arith.cmpi ne, %1, %c0_i32_0 : i32
    scf.if %2 {
      %cst_15 = arith.constant 0.000000e+00 : f32
      %20 = vector.broadcast %cst_15 : f32 to vector<8x8xf32>
      %c0_16 = arith.constant 0 : index
      %c0_17 = arith.constant 0 : index
      %21 = vector.load %arg7[%c0_16, %c0_17] : memref<8x8xf32, #tpu.memory_space<vmem>>, vector<8x8xf32>
      tpu.vector_store %arg7[%c0_16, %c0_17], %20 {strides = array<i32>} : memref<8x8xf32, #tpu.memory_space<vmem>>, vector<8x8xf32>,
      %cst_18 = arith.constant 0.000000e+00 : f32
      %22 = vector.broadcast %cst_18 : f32 to vector<8x1xf32>
      %c0_19 = arith.constant 0 : index
      %c0_20 = arith.constant 0 : index
      %23 = vector.load %arg8[%c0_19, %c0_20] : memref<8x1xf32, #tpu.memory_space<vmem>>, vector<8x1xf32>
      tpu.vector_store %arg8[%c0_19, %c0_20], %22 {strides = array<i32>} : memref<8x1xf32, #tpu.memory_space<vmem>>, vector<8x1xf32>,
    } else {
    }
    %c0 = arith.constant 0 : index
    %c0_1 = arith.constant 0 : index
    %3 = vector.load %arg3[%c0, %c0_1] : memref<8x64xf32, #tpu.memory_space<vmem>>, vector<8x64xf32>
    %c0_2 = arith.constant 0 : index
    %c0_3 = arith.constant 0 : index
    %4 = vector.load %arg4[%c0_2, %c0_3] : memref<8x64xf32, #tpu.memory_space<vmem>>, vector<8x64xf32>
    %c0_4 = arith.constant 0 : index
    %c0_5 = arith.constant 0 : index
    %5 = vector.load %arg7[%c0_4, %c0_5] : memref<8x8xf32, #tpu.memory_space<vmem>>, vector<8x8xf32>
    %cst = arith.constant dense<0.000000e+00> : vector<8x8xf32>
    %6 = tpu.matmul %3, %4, %cst {dimension_numbers = #tpu.dot_dimension_numbers<[1], [1], [0], [0], [0, 0, 1, 0], [], []>} : vector<8x64xf32>, vector<8x64xf32>, vector<8x8xf32> -> vector<8x8xf32>
    %7 = arith.addf %5, %6 : vector<8x8xf32>
    %c0_6 = arith.constant 0 : index
    %c0_7 = arith.constant 0 : index
    %8 = vector.load %arg7[%c0_6, %c0_7] : memref<8x8xf32, #tpu.memory_space<vmem>>, vector<8x8xf32>
    tpu.vector_store %arg7[%c0_6, %c0_7], %7 {strides = array<i32>} : memref<8x8xf32, #tpu.memory_space<vmem>>, vector<8x8xf32>,
    %c0_8 = arith.constant 0 : index
    %c0_9 = arith.constant 0 : index
    %9 = vector.load %arg8[%c0_8, %c0_9] : memref<8x1xf32, #tpu.memory_space<vmem>>, vector<8x1xf32>
    %10 = arith.mulf %3, %3 : vector<8x64xf32>
    %11 = arith.mulf %4, %4 : vector<8x64xf32>
    %12 = arith.addf %10, %11 : vector<8x64xf32>
    %cst_10 = arith.constant dense<0.000000e+00> : vector<8xf32>
    %13 = vector.multi_reduction <add>, %12, %cst_10 [1] : vector<8x64xf32> to vector<8xf32>
    %14 = vector.shape_cast %13 : vector<8xf32> to vector<8x1xf32>
    %15 = arith.addf %9, %14 : vector<8x1xf32>
    %c0_11 = arith.constant 0 : index
    %c0_12 = arith.constant 0 : index
    %16 = vector.load %arg8[%c0_11, %c0_12] : memref<8x1xf32, #tpu.memory_space<vmem>>, vector<8x1xf32>
    tpu.vector_store %arg8[%c0_11, %c0_12], %15 {strides = array<i32>} : memref<8x1xf32, #tpu.memory_space<vmem>>, vector<8x1xf32>,
    %c0_i32_13 = arith.constant 0 : i32
    %17 = arith.cmpi eq, %arg1, %c0_i32_13 : i32
    %18 = arith.extui %17 : i1 to i32
    %c0_i32_14 = arith.constant 0 : i32
    %19 = arith.cmpi ne, %18, %c0_i32_14 : i32
    scf.if %19 {
      %c0_15 = arith.constant 0 : index
      %c0_16 = arith.constant 0 : index
      %20 = vector.load %arg7[%c0_15, %c0_16] : memref<8x8xf32, #tpu.memory_space<vmem>>, vector<8x8xf32>
      %21 = vector.shape_cast %20 : vector<8x8xf32> to vector<2x4x2x4xf32>
      %22 = tpu.iota {dimensions = array<i32: 0>} : vector<2x4x2x4xi32>
      %23 = tpu.iota {dimensions = array<i32: 2>} : vector<2x4x2x4xi32>
      %24 = arith.cmpi eq, %22, %23 : vector<2x4x2x4xi32>
      %cst_17 = arith.constant 0.000000e+00 : f32
      %25 = vector.broadcast %cst_17 : f32 to vector<2x4x2x4xf32>
      %26 = arith.select %24, %21, %25 : vector<2x4x2x4xi1>, vector<2x4x2x4xf32>
      %cst_18 = arith.constant dense<0.000000e+00> : vector<2x4x4xf32>
      %27 = vector.multi_reduction <add>, %26, %cst_18 [2] : vector<2x4x2x4xf32> to vector<2x4x4xf32>
      %28 = vector.shape_cast %27 : vector<2x4x4xf32> to vector<2x16xf32>
      %c0_19 = arith.constant 0 : index
      %c0_20 = arith.constant 0 : index
      %29 = vector.load %arg2[%c0_19, %c0_20] : memref<16x24xf32, #tpu.memory_space<vmem>>, vector<16x24xf32>
      %cst_21 = arith.constant dense<0.000000e+00> : vector<2x24xf32>
      %30 = tpu.matmul %28, %29, %cst_21 {dimension_numbers = #tpu.dot_dimension_numbers<[1], [0], [0], [1], [0, 0, 1, 1], [], []>} : vector<2x16xf32>, vector<16x24xf32>, vector<2x24xf32> -> vector<2x24xf32>
      %c0_22 = arith.constant 0 : index
      %c0_23 = arith.constant 0 : index
      %31 = vector.load %arg8[%c0_22, %c0_23] : memref<8x1xf32, #tpu.memory_space<vmem>>, vector<8x1xf32>
      %32 = vector.shape_cast %31 : vector<8x1xf32> to vector<2x4xf32>
      %cst_24 = arith.constant dense<0.000000e+00> : vector<2xf32>
      %33 = vector.multi_reduction <add>, %32, %cst_24 [1] : vector<2x4xf32> to vector<2xf32>
      %34 = vector.shape_cast %33 : vector<2xf32> to vector<2x1xf32>
      %35 = vector.broadcast %34 : vector<2x1xf32> to vector<2x24xf32>
      %36 = arith.addf %35, %30 : vector<2x24xf32>
      %cst_25 = arith.constant 3.906250e-03 : f32
      %37 = vector.broadcast %cst_25 : f32 to vector<2x24xf32>
      %38 = arith.mulf %36, %37 : vector<2x24xf32>
      %cst_26 = arith.constant dense<0x7F800000> : vector<2xf32>
      %39 = vector.multi_reduction <minimumf>, %38, %cst_26 [1] : vector<2x24xf32> to vector<2xf32>
      %40 = vector.shape_cast %39 : vector<2xf32> to vector<2x1xf32>
      %41 = tpu.iota {dimensions = array<i32: 1>} : vector<2x24xi32>
      %42 = vector.broadcast %40 : vector<2x1xf32> to vector<2x24xf32>
      %43 = arith.cmpf ole, %38, %42 : vector<2x24xf32>
      %c24_i32 = arith.constant 24 : i32
      %44 = vector.broadcast %c24_i32 : i32 to vector<2x24xi32>
      %45 = arith.select %43, %41, %44 : vector<2x24xi1>, vector<2x24xi32>
      %cst_27 = arith.constant dense<2147483647> : vector<2xi32>
      %46 = vector.multi_reduction <minsi>, %45, %cst_27 [1] : vector<2x24xi32> to vector<2xi32>
      %47 = vector.shape_cast %46 : vector<2xi32> to vector<2x1xi32>
      %cst_28 = arith.constant 0.000000e+00 : f32
      %48 = vector.broadcast %cst_28 : f32 to vector<2x1xf32>
      %49 = arith.maximumf %40, %48 : vector<2x1xf32>
      %50 = vector.shape_cast %49 : vector<2x1xf32> to vector<1x2x1xf32>
      %c0_29 = arith.constant 0 : index
      %c0_30 = arith.constant 0 : index
      %c0_31 = arith.constant 0 : index
      %51 = vector.load %arg5[%c0_29, %c0_30, %c0_31] : memref<1x2x1xf32, #tpu.memory_space<vmem>>, vector<1x2x1xf32>
      tpu.vector_store %arg5[%c0_29, %c0_30, %c0_31], %50 {strides = array<i32>} : memref<1x2x1xf32, #tpu.memory_space<vmem>>, vector<1x2x1xf32>,
      %52 = vector.shape_cast %47 : vector<2x1xi32> to vector<1x2x1xi32>
      %c0_32 = arith.constant 0 : index
      %c0_33 = arith.constant 0 : index
      %c0_34 = arith.constant 0 : index
      %53 = vector.load %arg6[%c0_32, %c0_33, %c0_34] : memref<1x2x1xi32, #tpu.memory_space<vmem>>, vector<1x2x1xi32>
      tpu.vector_store %arg6[%c0_32, %c0_33, %c0_34], %52 {strides = array<i32>} : memref<1x2x1xi32, #tpu.memory_space<vmem>>, vector<1x2x1xi32>,
    } else {
    }
    return
  }
  func.func @transform_0(%arg0: i32, %arg1: i32) -> (i32, i32) {
    %c0_i32 = arith.constant 0 : i32
    %c0_i32_0 = arith.constant 0 : i32
    %c0_i32_1 = arith.constant 0 : i32
    return %c0_i32, %c0_i32_0 : i32, i32
  }
  func.func @transform_1(%arg0: i32, %arg1: i32) -> (i32, i32) {
    %c0_i32 = arith.constant 0 : i32
    return %arg0, %arg1 : i32, i32
  }
  func.func @transform_2(%arg0: i32, %arg1: i32) -> (i32, i32) {
    %c0_i32 = arith.constant 0 : i32
    return %arg0, %arg1 : i32, i32
  }
  func.func @transform_3(%arg0: i32, %arg1: i32) -> (i32, i32, i32) {
    %c0_i32 = arith.constant 0 : i32
    %c0_i32_0 = arith.constant 0 : i32
    %c0_i32_1 = arith.constant 0 : i32
    return %arg0, %c0_i32, %c0_i32_0 : i32, i32, i32
  }
  func.func @transform_4(%arg0: i32, %arg1: i32) -> (i32, i32, i32) {
    %c0_i32 = arith.constant 0 : i32
    %c0_i32_0 = arith.constant 0 : i32
    %c0_i32_1 = arith.constant 0 : i32
    return %arg0, %c0_i32, %c0_i32_0 : i32, i32, i32
  }
}

</mosaic_0001>

<llo_original>
// kernel: tpu_custom_call.1
$region0: #{tpu_custom_call.1}
  #allocation0 [shape = 'u32[]', space=smem, size = 0x4, offset = 0x4, fixed_abs, tag = 'smem constant byte address 0x4 - core index']
  #allocation1 [shape = 'u32[72,128]{1,0:T(1,128)}', space=vmem, size = 0x9000, scoped, tag = 'internal scratch']
  #allocation2 [shape = 'f32[8,8]{1,0:T(8,128)}', space=vmem, size = 0x1000, scoped, tag = 'scratch operand']
  #allocation3 [shape = 'f32[8,1]{1,0:T(8,128)}', space=vmem, size = 0x1000, scoped, tag = 'scratch operand']
  %s0 = inlined_call_operand.hbm [shape: f32[16,24], index: 0, kind: input, shape index: {}]
  %s1 = inlined_call_operand.hbm [shape: f32[8,64], index: 1, kind: input, shape index: {}]
  %s2 = inlined_call_operand.hbm [shape: f32[8,64], index: 2, kind: input, shape index: {}]
  %s3 = inlined_call_operand.vmem [shape: f32[1,2,1], index: 3, kind: output, shape index: {0}]
  %s4 = inlined_call_operand.vmem [shape: s32[1,2,1], index: 4, kind: output, shape index: {1}]
  %5 = xla_tuple %s3, %s4
  %s6 = sld [smem:[#allocation0]]
  $region50: #{tpu_custom_call.1} parent=0
    _
  %s8 = ssub.s32 1, %s6
  %s9 = scalar_select 0, %s8, %s6
  $region1: #{tpu_custom_call.1} parent=0
    #allocation4 [shape = 'u8[8192]{0}', space=vmem, size = 0x2000, scoped, tag = 'input window, operand 0, single buffered']
    #allocation5 [shape = 's32[1]{0}', space=sflag, size = 0x4, scoped, tag = 'scoped memory for tpu_custom_call.1']
    #allocation6 [shape = 'u8[4096]{0}', space=vmem, size = 0x1000, scoped, tag = 'input window, operand 1, single buffered']
    #allocation7 [shape = 's32[1]{0}', space=sflag, size = 0x4, scoped, tag = 'scoped memory for tpu_custom_call.1']
    #allocation8 [shape = 'u8[4096]{0}', space=vmem, size = 0x1000, scoped, tag = 'input window, operand 2, single buffered']
    %10 = vsyncpa [#allocation5], 0
    %11 = vsyncpa [#allocation7], 0
    // Predicated region
    $region2: #{tpu_custom_call.1} parent=1 // pred_check
      _
    $region3: #{tpu_custom_call.1} parent=1 // pred_check_branch
      %13 = sbr.rel (0) target = $region5
    $region4: #{tpu_custom_call.1} parent=1 // pred_region
      %15 = vsyncadd [#allocation5], 0
      %s16 = sshll.u32 %s0, 4
      %s17 = int_to_ptr.hbm [resolvable:$true] %s16
      %s18 = sshll.u32 [#allocation4], 4
      %s19 = int_to_ptr.vmem [resolvable:$true] %s18
      %24 = dma.hbm_to_vmem [thread:$0]  %s17, 256, %s19, [#allocation5], 128, 128, 8
    $region5: #{tpu_custom_call.1} parent=1 // pred_fallthru
      _
    // Predicated region
    $region6: #{tpu_custom_call.1} parent=1 // pred_check
      _
    $region7: #{tpu_custom_call.1} parent=1 // pred_check_branch
      %26 = sbr.rel (0) target = $region9
    $region8: #{tpu_custom_call.1} parent=1 // pred_region
      %28 = vsyncadd [#allocation7], 0
      %s30 = sshll.u32 %s1, 4
      %s31 = int_to_ptr.hbm [resolvable:$true] %s30
      %s32 = sshll.u32 [#allocation6], 4
      %s33 = int_to_ptr.vmem [resolvable:$true] %s32
      %35 = dma.hbm_to_vmem [thread:$0]  %s31, 128, %s33, [#allocation7]
    $region9: #{tpu_custom_call.1} parent=1 // pred_fallthru
      _
    // Predicated region
    $region10: #{tpu_custom_call.1} parent=1 // pred_check
      _
    $region11: #{tpu_custom_call.1} parent=1 // pred_check_branch
      %37 = sbr.rel (0) target = $region13
    $region12: #{tpu_custom_call.1} parent=1 // pred_region
      %39 = vsyncadd [#allocation7], 0
      %s41 = sshll.u32 %s2, 4
      %s42 = int_to_ptr.hbm [resolvable:$true] %s41
      %s43 = sshll.u32 [#allocation8], 4
      %s44 = int_to_ptr.vmem [resolvable:$true] %s43
      %46 = dma.hbm_to_vmem [thread:$0]  %s42, 128, %s44, [#allocation7]
    $region13: #{tpu_custom_call.1} parent=1 // pred_fallthru
      _
    // Predicated region
    $region14: #{tpu_custom_call.1} parent=1 // pred_check
      _
    $region15: #{tpu_custom_call.1} parent=1 // pred_check_branch
      %48 = sbr.rel (0) target = $region17
    $region16: #{tpu_custom_call.1} parent=1 // pred_region
      %50 = dma.done [#allocation5], 256
    $region17: #{tpu_custom_call.1} parent=1 // pred_fallthru
      _
    // Predicated region
    $region18: #{tpu_custom_call.1} parent=1 // pred_check
      _
    $region19: #{tpu_custom_call.1} parent=1 // pred_check_branch
      %52 = sbr.rel (0) target = $region21
    $region20: #{tpu_custom_call.1} parent=1 // pred_region
      %54 = dma.done [#allocation7], 128
    $region21: #{tpu_custom_call.1} parent=1 // pred_fallthru
      _
    // Predicated region
    $region22: #{tpu_custom_call.1} parent=1 // pred_check
      _
    $region23: #{tpu_custom_call.1} parent=1 // pred_check_branch
      %56 = sbr.rel (0) target = $region25
    $region24: #{tpu_custom_call.1} parent=1 // pred_region
      %58 = dma.done [#allocation7], 128
    $region25: #{tpu_custom_call.1} parent=1 // pred_fallthru
      _
    %p59 = scmp.eq.s32.totalorder 0, 0
    // Predicated region
    $region26: #{tpu_custom_call.1} parent=1 // pred_check
      %p60 = pneg %p59
    $region27: #{tpu_custom_call.1} parent=1 // pred_check_branch
      %62 = sbr.rel (%p60) target = $region29
    $region28: #{tpu_custom_call.1} parent=1 // pred_region
      %vm63 = vcmask 64512
      %64 = vst.msk [vmem:[#allocation2] sm:$0xff] %vm63, 0.0
      %vm65 = vcmask 7168
      %66 = vst.msk [vmem:[#allocation3] sm:$0xff] %vm65, 0.0
    $region29: #{tpu_custom_call.1} parent=1 // pred_fallthru
      _
    %v67 = vld [vmem:[#allocation6] sm:$0xff]
    %v68 = vld [vmem:[#allocation8] sm:$0xff]
    %v69 = vld [vmem:[#allocation2] sm:$0xff]
    %vm70 = vcmask 523264
    %v72 = vsel %vm70, %v67, 0
    %v75 = vsel %vm70, %v68, 0
    %77 = vmatpush.xpose.msra.mxu0 0.0
    %78 = vmatpush.xpose.msra.mxu0 0.0
    %79 = vmatpush.xpose.msra.mxu0 0.0
    %80 = vmatpush.xpose.msra.mxu0 0.0
    %81 = vmatpush.xpose.msra.mxu0 0.0
    %82 = vmatpush.xpose.msra.mxu0 0.0
    %83 = vmatpush.xpose.msra.mxu0 0.0
    %84 = vmatpush.xpose.msra.mxu0 0.0
    %85 = vmatpush.xpose.msra.mxu0 0.0
    %86 = vmatpush.xpose.msra.mxu0 0.0
    %87 = vmatpush.xpose.msra.mxu0 0.0
    %88 = vmatpush.xpose.msra.mxu0 0.0
    %89 = vmatpush.xpose.msra.mxu0 0.0
    %90 = vmatpush.xpose.msra.mxu0 0.0
    %91 = vmatpush.xpose.msra.mxu0 0.0
    %92 = vmatpush.xpose.msra.mxu0 %v75
    %93 = vmatmul.f32.gmra.mxu0 %v72
    %v94 = vpop.f32.mrf.mxu0
    %v95 = vadd.f32 0.0, %v94
    %96 = vdwg.mxu0
    %v97 = vadd.f32 %v69, %v95
    %vm98 = vcmask 64512
    %99 = vst.msk [vmem:[#allocation2] sm:$0xff] %vm98, %v97
    %v100 = vld [vmem:[#allocation3] sm:$0xff]
    %v101 = vmul.f32 %v67, %v67
    %v102 = vmul.f32 %v68, %v68
    %v103 = vadd.f32 %v101, %v102
    %v104 = vsel %vm70, %v103, 0.0
    %105 = vadd.xlane.f32.xlu0 %v104
    %v106 = vpop.xlane.xlu0 %105
    %v107 = vadd.f32 %v100, %v106
    %vm108 = vcmask 7168
    %109 = vst.msk [vmem:[#allocation3] sm:$0xff] %vm108, %v107
    // Predicated region
    $region30: #{tpu_custom_call.1} parent=1 // pred_check
      %p110 = pneg %p59
    $region31: #{tpu_custom_call.1} parent=1 // pred_check_branch
      %112 = sbr.rel (%p110) target = $region33
    $region32: #{tpu_custom_call.1} parent=1 // pred_region
      %v113 = vld [vmem:[#allocation2] sm:$0xff]
      %115 = vrot.lane.b32.xlu0 %v113, 124
      %v116 = vpop.permute.xlu0 %115
      %v118 = vrot.slane %v113, 4
      %vm119 = vcmask 1047556
      %v120 = vsel %vm119, 0.0, %v118
      %v122 = vunpack.c.l.s4 1983009808
      %v123 = vunpack.c.0.s8 %v122
      %v124 = vperm.slane %v113, %v123
      %v126 = vunpack.c.l.s4 1983009808
      %v127 = vunpack.c.0.s8 %v126
      %v128 = vperm.slane %v120, %v127
      %v129 = vrot.slane %v116, 4
      %v130 = vsel %vm119, 0.0, %v129
      %v132 = vunpack.c.l.s4 1983009808
      %v133 = vunpack.c.0.s8 %v132
      %v134 = vperm.slane %v116, %v133
      %v136 = vunpack.c.l.s4 1983009808
      %v137 = vunpack.c.0.s8 %v136
      %v138 = vperm.slane %v130, %v137
      %v139 = vrot.slane %v134, 4
      %v140 = vsel %vm119, %v139, %v124
      %v141 = vrot.slane %v124, 4
      %v142 = vsel %vm119, %v134, %v141
      %v144 = vunpack.c.l.s4 1934713408
      %v145 = vunpack.c.0.s8 %v144
      %v146 = vperm.slane %v140, %v145
      %v148 = vunpack.c.l.s4 1934713408
      %v149 = vunpack.c.0.s8 %v148
      %v150 = vperm.slane %v142, %v149
      %v151 = vrot.slane %v138, 4
      %v152 = vsel %vm119, %v151, %v128
      %v153 = vrot.slane %v128, 4
      %v154 = vsel %vm119, %v138, %v153
      %v156 = vunpack.c.l.s4 1934713408
      %v157 = vunpack.c.0.s8 %v156
      %v158 = vperm.slane %v152, %v157
      %v160 = vunpack.c.l.s4 1934713408
      %v161 = vunpack.c.0.s8 %v160
      %v162 = vperm.slane %v154, %v161
      %v163 = vrot.slane %v146, 4
      %v164 = vsel %vm119, 0.0, %v163
      %v165 = vrot.slane %v150, 4
      %v166 = vsel %vm119, 0.0, %v165
      %v167 = vrot.slane %v158, 4
      %v168 = vsel %vm119, 0.0, %v167
      %v169 = vrot.slane %v162, 4
      %v170 = vsel %vm119, 0.0, %v169
      %v171 = vlaneseq
      %v172 = vshrl.u32 %v171, 7
      %vm173 = vcmp.eq.s32.totalorder %v172, 0
      %vm174 = vcmp.eq.s32.totalorder %v172, 1
      %v175 = vsel %vm173, %v146, 0.0
      %v176 = vsel %vm173, %v164, 0.0
      %v177 = vsel %vm173, %v150, 0.0
      %v178 = vsel %vm173, %v166, 0.0
      %v179 = vsel %vm174, %v158, 0.0
      %v180 = vsel %vm174, %v168, 0.0
      %v181 = vsel %vm174, %v162, 0.0
      %v182 = vsel %vm174, %v170, 0.0
      %vm183 = vcmask 25600
      %v184 = vsel %vm183, %v175, 0.0
      %v185 = vrot.slane %v184, 4
      %v186 = vadd.f32 %v184, %v185
      %v187 = vrot.slane %v186, 2
      %v188 = vadd.f32 %v186, %v187
      %v189 = vrot.slane %v188, 1
      %v190 = vadd.f32 %v188, %v189
      %v191 = vsel %vm183, %v176, 0.0
      %v192 = vrot.slane %v191, 4
      %v193 = vadd.f32 %v191, %v192
      %v194 = vrot.slane %v193, 2
      %v195 = vadd.f32 %v193, %v194
      %v196 = vrot.slane %v195, 1
      %v197 = vadd.f32 %v195, %v196
      %v198 = vsel %vm183, %v177, 0.0
      %v199 = vrot.slane %v198, 4
      %v200 = vadd.f32 %v198, %v199
      %v201 = vrot.slane %v200, 2
      %v202 = vadd.f32 %v200, %v201
      %v203 = vrot.slane %v202, 1
      %v204 = vadd.f32 %v202, %v203
      %v205 = vsel %vm183, %v178, 0.0
      %v206 = vrot.slane %v205, 4
      %v207 = vadd.f32 %v205, %v206
      %v208 = vrot.slane %v207, 2
      %v209 = vadd.f32 %v207, %v208
      %v210 = vrot.slane %v209, 1
      %v211 = vadd.f32 %v209, %v210
      %v212 = vsel %vm183, %v179, 0.0
      %v213 = vrot.slane %v212, 4
      %v214 = vadd.f32 %v212, %v213
      %v215 = vrot.slane %v214, 2
      %v216 = vadd.f32 %v214, %v215
      %v217 = vrot.slane %v216, 1
      %v218 = vadd.f32 %v216, %v217
      %v219 = vsel %vm183, %v180, 0.0
      %v220 = vrot.slane %v219, 4
      %v221 = vadd.f32 %v219, %v220
      %v222 = vrot.slane %v221, 2
      %v223 = vadd.f32 %v221, %v222
      %v224 = vrot.slane %v223, 1
      %v225 = vadd.f32 %v223, %v224
      %v226 = vsel %vm183, %v181, 0.0
      %v227 = vrot.slane %v226, 4
      %v228 = vadd.f32 %v226, %v227
      %v229 = vrot.slane %v228, 2
      %v230 = vadd.f32 %v228, %v229
      %v231 = vrot.slane %v230, 1
      %v232 = vadd.f32 %v230, %v231
      %v233 = vsel %vm183, %v182, 0.0
      %v234 = vrot.slane %v233, 4
      %v235 = vadd.f32 %v233, %v234
      %v236 = vrot.slane %v235, 2
      %v237 = vadd.f32 %v235, %v236
      %v238 = vrot.slane %v237, 1
      %v239 = vadd.f32 %v237, %v238
      %vm248 = vcmask 1041409
      %v249 = vsel %vm248, %v197, %v190
      %vm250 = vcmask 1042434
      %v251 = vsel %vm250, %v204, %v249
      %vm252 = vcmask 1043459
      %v253 = vsel %vm252, %v211, %v251
      %v254 = vsel %vm248, %v225, %v218
      %v255 = vsel %vm250, %v232, %v254
      %v256 = vsel %vm252, %v239, %v255
      %v259 = vunpack.c.l.s4 1983009808
      %v260 = vunpack.c.0.s8 %v259
      %v261 = vperm.slane %v253, %v260
      %v264 = vunpack.c.l.s4 1983009808
      %v265 = vunpack.c.0.s8 %v264
      %v266 = vperm.slane %v256, %v265
      %v267 = vrot.slane %v266, 4
      %v268 = vsel %vm119, %v267, %v261
      %v269 = vrot.slane %v261, 4
      %v270 = vsel %vm119, %v266, %v269
      %v272 = vunpack.c.l.s4 1934713408
      %v273 = vunpack.c.0.s8 %v272
      %v274 = vperm.slane %v268, %v273
      %v276 = vunpack.c.l.s4 1934713408
      %v277 = vunpack.c.0.s8 %v276
      %v278 = vperm.slane %v270, %v277
      %v279 = vrot.slane %v274, 4
      %v280 = vsel %vm119, 0.0, %v279
      %v281 = vrot.slane %v278, 4
      %v282 = vsel %vm119, 0.0, %v281
      %284 = vrot.lane.b32.xlu0 %v280, 4
      %v285 = vpop.permute.xlu0 %284
      %288 = vrot.lane.b32.xlu0 %v278, 8
      %v289 = vpop.permute.xlu0 %288
      %292 = vrot.lane.b32.xlu0 %v282, 12
      %v293 = vpop.permute.xlu0 %292
      %vm295 = vcmask 31744
      %v296 = vsel %vm295, %v274, %v285
      %v297 = vsel %vm98, %v296, %v289
      %vm298 = vcmask 97280
      %v299 = vsel %vm298, %v297, %v293
      %v300 = vld [vmem:[#allocation4] sm:$0xff]
      %v301 = vld [vmem:[#allocation4 + $0x8] sm:$0xff]
      %vm302 = vcmask 130048
      %v304 = vsel %vm302, %v299, 0
      %306 = vmatpush.msra.mxu0 0.0
      %307 = vmatpush.msra.mxu0 0.0
      %308 = vmatpush.msra.mxu0 0.0
      %309 = vmatpush.msra.mxu0 0.0
      %310 = vmatpush.msra.mxu0 0.0
      %311 = vmatpush.msra.mxu0 0.0
      %312 = vmatpush.msra.mxu0 0.0
      %313 = vmatpush.msra.mxu0 0.0
      %314 = vmatpush.msra.mxu0 0.0
      %315 = vmatpush.msra.mxu0 0.0
      %316 = vmatpush.msra.mxu0 0.0
      %317 = vmatpush.msra.mxu0 0.0
      %318 = vmatpush.msra.mxu0 0.0
      %319 = vmatpush.msra.mxu0 0.0
      %320 = vmatpush.msra.mxu0 %v301
      %321 = vmatpush.msra.mxu0 %v300
      %322 = vmatmul.f32.gmra.mxu0 %v304
      %v323 = vpop.f32.mrf.mxu0
      %v324 = vadd.f32 0.0, %v323
      %325 = vdwg.mxu0
      %v326 = vld [vmem:[#allocation3] sm:$0xff]
      %v328 = vrot.slane %v326, 4
      %329 = vst [vmem:[#allocation1] ss:$2 sm:$0xff] %v326
      %v330 = vld.sshfl [vmem:[#allocation1] sm:$0xff pattern:$0x75316420]
      %s331 = scalar_lea.vmem [#allocation1], 16
      %332 = vst [vmem:[%s331] ss:$2 sm:$0xff] %v328
      %v333 = vld.sshfl [vmem:[#allocation1 + $0x10] sm:$0xff pattern:$0x75316420]
      %334 = vset.pattern.permute.xlu0 0
      %335 = vperm.xlu0 %334, %v330
      %v336 = vpop.permute.xlu0 %335
      %337 = vset.pattern.permute.xlu0 0
      %338 = vperm.xlu0 %337, %v333
      %v339 = vpop.permute.xlu0 %338
      %v340 = vlaneseq
      %v341 = vand.u32 %v340, 127
      %v342 = vperm.slane %v336, %v341
      %v343 = vperm.slane %v339, %v341
      %v344 = vsel %vm248, %v343, %v342
      %v346 = vsel %vm183, %v344, 0.0
      %347 = vadd.xlane.f32.xlu0 %v346
      %v348 = vpop.xlane.xlu0 %347
      %v349 = vadd.f32 %v348, %v324
      %v350 = vmul.f32 %v349, 0.00390625
      %vm351 = vcmask 189440
      %v352 = vsel %vm351, %v350, inf
      %353 = vmin.xlane.f32.xlu0 %v352
      %v354 = vpop.xlane.xlu0 %353
      %vm355 = vcmp.le.f32.partialorder %v350, %v354
      %v356 = vsel %vm355, %v341, 24
      %v357 = vsel %vm351, %v356, 2147483647
      %v358 = vand.u32 %v357, 65535
      %v359 = vshra.s32 %v357, 16
      %v360 = vcvt.s32.f32 %v358
      %v361 = vcvt.s32.f32 %v359
      %362 = vmin.xlane.f32.xlu0 %v361
      %v363 = vpop.xlane.xlu0 %362
      %vm364 = vcmp.eq.f32.partialorder %v361, %v363
      %v365 = vsel %vm364, %v360, inf
      %366 = vmin.xlane.f32.xlu0 %v365
      %v367 = vpop.xlane.xlu0 %366
      %v368 = vcvt.f32.s32 %v367
      %v369 = vcvt.f32.s32 %v363
      %v370 = vshll.u32 %v369, 16
      %v371 = vadd.s32 %v370, %v368
      %v372 = vmax.f32 %v354, 0.0
      %vm373 = vcmask 1024
      %374 = vst.msk [vmem:[%s3] sm:$0x3] %vm373, %v372
      %375 = vst.msk [vmem:[%s4] sm:$0x3] %vm373, %v371
    $region33: #{tpu_custom_call.1} parent=1 // pred_fallthru
      _
    // Predicated region
    $region34: #{tpu_custom_call.1} parent=1 // pred_check
      _
    $region35: #{tpu_custom_call.1} parent=1 // pred_check_branch
      %377 = sbr.rel (0) target = $region37
    $region36: #{tpu_custom_call.1} parent=1 // pred_region
      _
    $region37: #{tpu_custom_call.1} parent=1 // pred_fallthru
      _
    // Predicated region
    $region38: #{tpu_custom_call.1} parent=1 // pred_check
      _
    $region39: #{tpu_custom_call.1} parent=1 // pred_check_branch
      %379 = sbr.rel (0) target = $region41
    $region40: #{tpu_custom_call.1} parent=1 // pred_region
      _
    $region41: #{tpu_custom_call.1} parent=1 // pred_fallthru
      _
    // Predicated region
    $region42: #{tpu_custom_call.1} parent=1 // pred_check
      _
    $region43: #{tpu_custom_call.1} parent=1 // pred_check_branch
      %381 = sbr.rel (0) target = $region45
    $region44: #{tpu_custom_call.1} parent=1 // pred_region
      _
    $region45: #{tpu_custom_call.1} parent=1 // pred_fallthru
      _
    // Predicated region
    $region46: #{tpu_custom_call.1} parent=1 // pred_check
      _
    $region47: #{tpu_custom_call.1} parent=1 // pred_check_branch
      %383 = sbr.rel (0) target = $region49
    $region48: #{tpu_custom_call.1} parent=1 // pred_region
      _
    $region49: #{tpu_custom_call.1} parent=1 // pred_fallthru
      _
    %384 = vsyncpa [#allocation5], 1
    %385 = vsyncpa [#allocation7], 1

</llo_original>
